<compile_context>
chip_gen: v7x
topology: tpu7x:2x2x1
jax: 0.10.0
libtpu: 0.0.40
codegen_flags: <defaults>
</compile_context>

<pallas_src>
import functools

import jax
import jax.numpy as jnp
import numpy as np
from jax.experimental import pallas as pl
from jax.experimental.pallas import tpu as pltpu


# --------------------------------------------------------------------------
# Kernel 1: fused 3x3 convs (offset_pred & attn_pred) as one im2col matmul
#           + hoisted output projection x @ W_out (both on the MXU).
#           All operands / outputs are lane-dense (last dim 128-padded).
# --------------------------------------------------------------------------
def _conv_proj_kernel(p_ref, x_ref, wc_ref, bc_ref, wo_ref, logit_ref, xw_ref):
    # p_ref: (tm, 9D), wc_ref: (9D, C_pad), bc_ref: (1, C_pad)
    logit_ref[...] = (jnp.dot(p_ref[...], wc_ref[...],
                              preferred_element_type=jnp.float32)
                      + bc_ref[...]).astype(logit_ref.dtype)
    # x_ref: (tm, D_pad), wo_ref: (D_pad, D_pad) -> pre-projected source feats
    xw_ref[...] = jnp.dot(x_ref[...], wo_ref[...],
                          preferred_element_type=jnp.float32).astype(xw_ref.dtype)


# --------------------------------------------------------------------------
# Kernel 2: softmax over points (+ folded 1/nhead) + deformable bilinear
#           sampling via a dense S^T one-hot matrix + single MXU matmul.
#           Coordinate / weight math is vectorized over all (head, point)
#           pairs; only the one-hot accumulation remains in the 16x4 loop.
# --------------------------------------------------------------------------
def _deform_kernel(xw_ref, gx_ref, gy_ref, alog_ref, bout_ref, o_ref,
                   *, H, W, nhead, num_points, nq_pad):
    N = H * W
    xw = xw_ref[0]                       # (N, D_pad)  x @ W_out, source order

    # softmax over num_points; 1/nhead head-mean folded into EUP reciprocal
    alog = alog_ref[0]                   # (nhead, P, nq_pad)
    m = jnp.max(alog, axis=1, keepdims=True)
    e = jnp.exp(alog - m)
    denom = jnp.sum(e, axis=1, keepdims=True) * float(nhead)
    attn = e * pl.reciprocal(denom, approx=True)      # sums to 1/nhead per head

    # ---- vectorized grid_sample coordinate math over all (h, p) pairs ----
    gx = gx_ref[0]                       # (nhead, P, nq_pad)
    gy = gy_ref[0]
    ix = ((gx + 1.0) * W - 1.0) * 0.5    # align_corners=False
    iy = ((gy + 1.0) * H - 1.0) * 0.5
    x0f = jnp.floor(ix)
    y0f = jnp.floor(iy)
    lx = ix - x0f
    ly = iy - y0f
    x0 = x0f.astype(jnp.int32)
    y0 = y0f.astype(jnp.int32)
    x1 = x0 + 1
    y1 = y0 + 1
    # Zero the corner weight where the corner is out of range (zero-padding
    # semantics) BEFORE the one-hot: OOB corners may alias valid token ids.
    vx0 = (x0 >= 0) & (x0 < W)
    vx1 = (x1 >= 0) & (x1 < W)
    vy0 = (y0 >= 0) & (y0 < H)
    vy1 = (y1 >= 0) & (y1 < H)
    wx0 = jnp.where(vx0, 1.0 - lx, 0.0)
    wx1 = jnp.where(vx1, lx, 0.0)
    wy0 = jnp.where(vy0, (1.0 - ly) * attn, 0.0)       # attention folded here
    wy1 = jnp.where(vy1, ly * attn, 0.0)
    w00 = wx0 * wy0
    w01 = wx1 * wy0
    w10 = wx0 * wy1
    w11 = wx1 * wy1
    s00 = y0 * W + x0
    s01 = y0 * W + x1
    s10 = y1 * W + x0
    s11 = y1 * W + x1

    # S^T[s, q]: source tokens on sublanes, (lane-padded) queries on lanes.
    row = jax.lax.broadcasted_iota(jnp.int32, (N, nq_pad), 0)   # row[s, q] = s
    s_t = jnp.zeros((N, nq_pad), jnp.float32)
    for h in range(nhead):
        for p in range(num_points):
            for w_arr, s_arr in ((w00, s00), (w01, s01), (w10, s10), (w11, s11)):
                wv = w_arr[h, p]                                 # (nq_pad,)
                sv = s_arr[h, p]                                 # (nq_pad,) i32
                s_t = s_t + jnp.where(row == sv[None, :], wv[None, :], 0.0)

    # out[q, :] = sum_s S^T[s, q] * xw[s, :]   (contract the source axis)
    out = jax.lax.dot_general(s_t, xw, (((0,), (0,)), ((), ())),
                              preferred_element_type=jnp.float32)  # (nq_pad, D_pad)
    # Dummy padded queries are sliced away before the (lane-dense) store.
    o_ref[0] = (out[:N, :] + bout_ref[...]).astype(o_ref.dtype)


def _pick_tile_m(m_total, max_tile=512):
    """Largest multiple-of-8 tile dividing m_total (<= max_tile).  Only split
    into >= 2 grid steps (v7x megacore) when each step keeps >= 256 MXU rows."""
    candidates = [t for t in range(8, min(max_tile, m_total) + 1, 8)
                  if m_total % t == 0]
    if not candidates:
        return m_total
    multi = [t for t in candidates if m_total // t >= 2 and t >= 256]
    if multi:
        return max(multi)
    return max(candidates)


# --------------------------------------------------------------------------
# Wrapper
# --------------------------------------------------------------------------
def deformable_attention(x, H, W, params, *, nhead, num_points):
    B, N, D = x.shape
    assert N == H * W
    P = num_points
    HP = nhead * P
    C_off = HP * 2
    C_tot = C_off + HP
    C_pad = ((C_tot + 127) // 128) * 128          # lane-dense conv output
    D_PAD = ((D + 127) // 128) * 128              # lane-dense feature path
    NQ_PAD = ((N + 127) // 128) * 128             # lane-dense query axis

    # ---- glue: im2col patches; patch channel r = (ky*3 + kx)*D + cin
    xs = x.reshape(B, H, W, D)
    xpad = jnp.pad(xs, ((0, 0), (1, 1), (1, 1), (0, 0)))
    patches = jnp.concatenate(
        [xpad[:, ky:ky + H, kx:kx + W, :] for ky in range(3) for kx in range(3)],
        axis=-1).reshape(B * N, 9 * D)
    x2d = jnp.pad(x.reshape(B * N, D), ((0, 0), (0, D_PAD - D)))

    wc_pad = jnp.pad(params["w_conv"], ((0, 0), (0, C_pad - C_tot)))
    bc_pad = jnp.pad(params["b_conv"], ((0, 0), (0, C_pad - C_tot)))
    wo_pad = jnp.pad(params["w_out"], ((0, D_PAD - D), (0, D_PAD - D)))
    bo_pad = jnp.pad(params["b_out"], ((0, 0), (0, D_PAD - D)))

    M = B * N
    tile_m = _pick_tile_m(M)
    grid_m = M // tile_m

    logits_pad, xw = pl.pallas_call(
        _conv_proj_kernel,
        out_shape=(jax.ShapeDtypeStruct((M, C_pad), jnp.float32),
                   jax.ShapeDtypeStruct((M, D_PAD), jnp.float32)),
        grid=(grid_m,),
        in_specs=[pl.BlockSpec((tile_m, 9 * D), lambda m: (m, 0)),
                  pl.BlockSpec((tile_m, D_PAD), lambda m: (m, 0)),
                  pl.BlockSpec((9 * D, C_pad), lambda m: (0, 0)),
                  pl.BlockSpec((1, C_pad), lambda m: (0, 0)),
                  pl.BlockSpec((D_PAD, D_PAD), lambda m: (0, 0))],
        out_specs=(pl.BlockSpec((tile_m, C_pad), lambda m: (m, 0)),
                   pl.BlockSpec((tile_m, D_PAD), lambda m: (m, 0))),
        compiler_params=pltpu.CompilerParams(dimension_semantics=("parallel",)),
    )(patches, x2d, wc_pad, bc_pad, wo_pad)

    conv_out = logits_pad[:, :C_tot].reshape(B, N, C_tot)
    xw = xw.reshape(B, N, D_PAD)

    # ---- glue: offsets -> sampling grid (replicates the torch permute/reshape)
    off = conv_out[..., :C_off].reshape(B, H, W, nhead, P, 2)
    alog_tok = conv_out[..., C_off:]
    offp = jnp.transpose(off, (0, 5, 3, 4, 1, 2))                    # (B,2,nh,P,H,W)
    rx = jnp.linspace(0.0, 1.0, W, dtype=jnp.float32)
    ry = jnp.linspace(0.0, 1.0, H, dtype=jnp.float32)
    ref = jnp.stack([jnp.broadcast_to(rx[None, :], (H, W)),
                     jnp.broadcast_to(ry[:, None], (H, W))], axis=0)  # (2,H,W)
    pos = ref[None, :, None, None, :, :] + offp * 0.1
    # exactly mirrors torch: pos.permute(0,2,3,5,4,1).reshape(B*nh*P, H, W, 2)
    pos = jnp.transpose(pos, (0, 2, 3, 5, 4, 1)).reshape(B * HP, H, W, 2)
    gx = pos[..., 0].reshape(B, nhead, P, N)
    gy = pos[..., 1].reshape(B, nhead, P, N)
    alog = jnp.transpose(alog_tok.reshape(B, N, nhead, P), (0, 2, 3, 1))  # (B,nh,P,N)

    # pad query axis to a multiple of 128 lanes (dummy queries discarded later)
    qpad = NQ_PAD - N
    gx = jnp.pad(gx, ((0, 0), (0, 0), (0, 0), (0, qpad)))
    gy = jnp.pad(gy, ((0, 0), (0, 0), (0, 0), (0, qpad)))
    alog = jnp.pad(alog, ((0, 0), (0, 0), (0, 0), (0, qpad)))

    out_pad = pl.pallas_call(
        functools.partial(_deform_kernel, H=H, W=W, nhead=nhead,
                          num_points=P, nq_pad=NQ_PAD),
        out_shape=jax.ShapeDtypeStruct((B, N, D_PAD), jnp.float32),
        grid=(B,),
        in_specs=[pl.BlockSpec((1, N, D_PAD), lambda b: (b, 0, 0)),
                  pl.BlockSpec((1, nhead, P, NQ_PAD), lambda b: (b, 0, 0, 0)),
                  pl.BlockSpec((1, nhead, P, NQ_PAD), lambda b: (b, 0, 0, 0)),
                  pl.BlockSpec((1, nhead, P, NQ_PAD), lambda b: (b, 0, 0, 0)),
                  pl.BlockSpec((1, D_PAD), lambda b: (0, 0))],
        out_specs=pl.BlockSpec((1, N, D_PAD), lambda b: (b, 0, 0)),
        compiler_params=pltpu.CompilerParams(dimension_semantics=("parallel",)),
    )(xw, gx, gy, alog, bo_pad)
    return out_pad[:, :, :D]


# --------------------------------------------------------------------------
# Pure-JAX reference (independent implementation: lax.conv + gather bilinear)
# --------------------------------------------------------------------------
def reference_forward(x, H, W, params, *, nhead, num_points):
    B, N, D = x.shape
    P = num_points
    HP = nhead * P
    C_off = HP * 2
    xs = x.reshape(B, H, W, D)
    wc = params["w_conv"].reshape(3, 3, D, -1)
    logits = jax.lax.conv_general_dilated(
        xs, wc, (1, 1), "SAME",
        dimension_numbers=("NHWC", "HWIO", "NHWC"),
        precision=jax.lax.Precision.HIGHEST) + params["b_conv"][0]
    off = logits[..., :C_off].reshape(B, H, W, nhead, P, 2)
    attn = jax.nn.softmax(logits[..., C_off:].reshape(B, H, W, nhead, P), axis=-1)
    attn = jnp.transpose(attn, (0, 3, 4, 1, 2))                      # (B,nh,P,H,W)
    offp = jnp.transpose(off, (0, 5, 3, 4, 1, 2))                    # (B,2,nh,P,H,W)
    rx = jnp.linspace(0.0, 1.0, W, dtype=jnp.float32)
    ry = jnp.linspace(0.0, 1.0, H, dtype=jnp.float32)
    ref = jnp.stack([jnp.broadcast_to(rx[None, :], (H, W)),
                     jnp.broadcast_to(ry[:, None], (H, W))], axis=0)
    pos = ref[None, :, None, None, :, :] + offp * 0.1
    pos = jnp.transpose(pos, (0, 2, 3, 5, 4, 1)).reshape(B * HP, H, W, 2)
    xrep = jnp.repeat(xs, HP, axis=0)                                # (B*HP,H,W,D)
    gxp = ((pos[..., 0] + 1.0) * W - 1.0) * 0.5
    gyp = ((pos[..., 1] + 1.0) * H - 1.0) * 0.5
    x0 = jnp.floor(gxp).astype(jnp.int32)
    y0 = jnp.floor(gyp).astype(jnp.int32)
    lx = gxp - x0
    ly = gyp - y0
    flat = xrep.reshape(B * HP, N, D)

    def gather(yi, xi):
        valid = ((xi >= 0) & (xi < W) & (yi >= 0) & (yi < H)).astype(x.dtype)
        idx = jnp.clip(yi, 0, H - 1) * W + jnp.clip(xi, 0, W - 1)
        g = jnp.take_along_axis(flat, idx.reshape(B * HP, N, 1), axis=1)
        return g.reshape(B * HP, H, W, D) * valid[..., None]

    s = (gather(y0, x0) * ((1 - lx) * (1 - ly))[..., None]
         + gather(y0, x0 + 1) * (lx * (1 - ly))[..., None]
         + gather(y0 + 1, x0) * ((1 - lx) * ly)[..., None]
         + gather(y0 + 1, x0 + 1) * (lx * ly)[..., None])
    sampled = s.reshape(B, nhead, P, H, W, D)
    out = jnp.sum(sampled * attn[..., None], axis=2)                 # (B,nh,H,W,D)
    out = jnp.mean(out, axis=1).reshape(B, N, D)
    return (jnp.dot(out, params["w_out"], precision=jax.lax.Precision.HIGHEST)
            + params["b_out"][0])


if __name__ == "__main__":
    B, H, W, D = 2, 8, 8, 32
    nhead, num_points = 4, 4
    N = H * W
    HP = nhead * num_points
    C_tot = HP * 2 + HP

    key = jax.random.PRNGKey(0)
    kx, kc, ko = jax.random.split(key, 3)
    x = jax.random.normal(kx, (B, N, D), dtype=jnp.float32)

    # Deterministic synthetic params. Note: the torch module zero-inits
    # offset_pred (offsets would be identically 0); we use small random conv
    # weights so the deformable-sampling hot path is actually exercised.
    params = {
        "w_conv": 0.05 * jax.random.normal(kc, (9 * D, C_tot), dtype=jnp.float32),
        "b_conv": jnp.zeros((1, C_tot), dtype=jnp.float32),
        "w_out": (1.0 / np.sqrt(D)) * jax.random.normal(ko, (D, D), dtype=jnp.float32),
        "b_out": 0.01 * jnp.ones((1, D), dtype=jnp.float32),
    }

    out = deformable_attention(x, H, W, params, nhead=nhead, num_points=num_points)
    out = jax.block_until_ready(out)
    assert out.shape == (B, N, D)

    ref = reference_forward(x, H, W, params, nhead=nhead, num_points=num_points)
    np.testing.assert_allclose(np.asarray(out), np.asarray(ref), rtol=2e-2, atol=2e-2)

    print("KERNEL_OK")
</pallas_src>

<mosaic_0001>
module attributes {stable_mosaic.version = 11 : i64} {
  func.func @_conv_proj_kernel(%arg0: i32, %arg1: memref<128x288xf32, #tpu.memory_space<vmem>>, %arg2: memref<128x128xf32, #tpu.memory_space<vmem>>, %arg3: memref<288x128xf32, #tpu.memory_space<vmem>>, %arg4: memref<1x128xf32, #tpu.memory_space<vmem>>, %arg5: memref<128x128xf32, #tpu.memory_space<vmem>>, %arg6: memref<128x128xf32, #tpu.memory_space<vmem>>, %arg7: memref<128x128xf32, #tpu.memory_space<vmem>>) attributes {dimension_semantics = [#tpu.dimension_semantics<parallel>], iteration_bounds = array<i64: 1>, scalar_prefetch = 0 : i64, scratch_operands = 0 : i64, tpu.core_type = #tpu.core_type<tc>, window_params = [{transform_indices = @transform_0, window_bounds = array<i64: 128, 288>}, {transform_indices = @transform_1, window_bounds = array<i64: 128, 128>}, {pipeline_mode = #tpu.pipeline_mode<synchronous>, transform_indices = @transform_2, window_bounds = array<i64: 288, 128>}, {pipeline_mode = #tpu.pipeline_mode<synchronous>, transform_indices = @transform_3, window_bounds = array<i64: 1, 128>}, {pipeline_mode = #tpu.pipeline_mode<synchronous>, transform_indices = @transform_4, window_bounds = array<i64: 128, 128>}, {transform_indices = @transform_5, window_bounds = array<i64: 128, 128>}, {transform_indices = @transform_6, window_bounds = array<i64: 128, 128>}]} {
    %c0 = arith.constant 0 : index
    %c0_0 = arith.constant 0 : index
    %0 = vector.load %arg1[%c0, %c0_0] : memref<128x288xf32, #tpu.memory_space<vmem>>, vector<128x288xf32>
    %c0_1 = arith.constant 0 : index
    %c0_2 = arith.constant 0 : index
    %1 = vector.load %arg3[%c0_1, %c0_2] : memref<288x128xf32, #tpu.memory_space<vmem>>, vector<288x128xf32>
    %cst = arith.constant dense<0.000000e+00> : vector<128x128xf32>
    %2 = tpu.matmul %0, %1, %cst {dimension_numbers = #tpu.dot_dimension_numbers<[1], [0], [0], [1], [0, 0, 1, 1], [], []>} : vector<128x288xf32>, vector<288x128xf32>, vector<128x128xf32> -> vector<128x128xf32>
    %c0_3 = arith.constant 0 : index
    %c0_4 = arith.constant 0 : index
    %3 = vector.load %arg4[%c0_3, %c0_4] : memref<1x128xf32, #tpu.memory_space<vmem>>, vector<1x128xf32>
    %4 = vector.broadcast %3 : vector<1x128xf32> to vector<128x128xf32>
    %5 = arith.addf %2, %4 : vector<128x128xf32>
    %c0_5 = arith.constant 0 : index
    %c0_6 = arith.constant 0 : index
    %6 = vector.load %arg6[%c0_5, %c0_6] : memref<128x128xf32, #tpu.memory_space<vmem>>, vector<128x128xf32>
    tpu.vector_store %arg6[%c0_5, %c0_6], %5 {strides = array<i32>} : memref<128x128xf32, #tpu.memory_space<vmem>>, vector<128x128xf32>,
    %c0_7 = arith.constant 0 : index
    %c0_8 = arith.constant 0 : index
    %7 = vector.load %arg2[%c0_7, %c0_8] : memref<128x128xf32, #tpu.memory_space<vmem>>, vector<128x128xf32>
    %c0_9 = arith.constant 0 : index
    %c0_10 = arith.constant 0 : index
    %8 = vector.load %arg5[%c0_9, %c0_10] : memref<128x128xf32, #tpu.memory_space<vmem>>, vector<128x128xf32>
    %cst_11 = arith.constant dense<0.000000e+00> : vector<128x128xf32>
    %9 = tpu.matmul %7, %8, %cst_11 {dimension_numbers = #tpu.dot_dimension_numbers<[1], [0], [0], [1], [0, 0, 1, 1], [], []>} : vector<128x128xf32>, vector<128x128xf32>, vector<128x128xf32> -> vector<128x128xf32>
    %c0_12 = arith.constant 0 : index
    %c0_13 = arith.constant 0 : index
    %10 = vector.load %arg7[%c0_12, %c0_13] : memref<128x128xf32, #tpu.memory_space<vmem>>, vector<128x128xf32>
    tpu.vector_store %arg7[%c0_12, %c0_13], %9 {strides = array<i32>} : memref<128x128xf32, #tpu.memory_space<vmem>>, vector<128x128xf32>,
    return
  }
  func.func @transform_0(%arg0: i32) -> (i32, i32) {
    %c0_i32 = arith.constant 0 : i32
    %c0_i32_0 = arith.constant 0 : i32
    return %arg0, %c0_i32 : i32, i32
  }
  func.func @transform_1(%arg0: i32) -> (i32, i32) {
    %c0_i32 = arith.constant 0 : i32
    %c0_i32_0 = arith.constant 0 : i32
    return %arg0, %c0_i32 : i32, i32
  }
  func.func @transform_2(%arg0: i32) -> (i32, i32) {
    %c0_i32 = arith.constant 0 : i32
    %c0_i32_0 = arith.constant 0 : i32
    %c0_i32_1 = arith.constant 0 : i32
    return %c0_i32, %c0_i32_0 : i32, i32
  }
  func.func @transform_3(%arg0: i32) -> (i32, i32) {
    %c0_i32 = arith.constant 0 : i32
    %c0_i32_0 = arith.constant 0 : i32
    %c0_i32_1 = arith.constant 0 : i32
    return %c0_i32, %c0_i32_0 : i32, i32
  }
  func.func @transform_4(%arg0: i32) -> (i32, i32) {
    %c0_i32 = arith.constant 0 : i32
    %c0_i32_0 = arith.constant 0 : i32
    %c0_i32_1 = arith.constant 0 : i32
    return %c0_i32, %c0_i32_0 : i32, i32
  }
  func.func @transform_5(%arg0: i32) -> (i32, i32) {
    %c0_i32 = arith.constant 0 : i32
    %c0_i32_0 = arith.constant 0 : i32
    return %arg0, %c0_i32 : i32, i32
  }
  func.func @transform_6(%arg0: i32) -> (i32, i32) {
    %c0_i32 = arith.constant 0 : i32
    %c0_i32_0 = arith.constant 0 : i32
    return %arg0, %c0_i32 : i32, i32
  }
}

</mosaic_0001>

<llo_original>
// kernel: tpu_custom_call.1
$region0: #{tpu_custom_call.1}
  #allocation0 [shape = 'u32[]', space=smem, size = 0x4, offset = 0x4, fixed_abs, tag = 'smem constant byte address 0x4 - core index']
  #allocation1 [shape = 'u32[144,128]{1,0:T(1,128)}', space=vmem, size = 0x12000, scoped, tag = 'internal scratch']
  %s0 = inlined_call_operand.vmem [shape: f32[128,288], index: 0, kind: input, shape index: {}]
  %s1 = inlined_call_operand.vmem [shape: f32[128,128], index: 1, kind: input, shape index: {}]
  %s2 = inlined_call_operand.vmem [shape: f32[288,128], index: 2, kind: input, shape index: {}]
  %s3 = inlined_call_operand.vmem [shape: f32[1,128], index: 3, kind: input, shape index: {}]
  %s4 = inlined_call_operand.vmem [shape: f32[128,128], index: 4, kind: input, shape index: {}]
  %s5 = inlined_call_operand.hbm [shape: f32[128,128], index: 5, kind: output, shape index: {0}]
  %s6 = inlined_call_operand.hbm [shape: f32[128,128], index: 6, kind: output, shape index: {1}]
  %7 = xla_tuple %s5, %s6
  %s8 = sld [smem:[#allocation0]]
  $region38: #{tpu_custom_call.1} parent=0
    _
  %s10 = ssub.s32 1, %s8
  %s11 = scalar_select 0, %s10, %s8
  $region1: #{tpu_custom_call.1} parent=0
    #allocation2 [shape = 'u8[65536]{0}', space=vmem, size = 0x10000, scoped, tag = 'output window, operand 0, single buffered']
    #allocation3 [shape = 's32[1]{0}', space=sflag, size = 0x4, scoped, tag = 'scoped memory for tpu_custom_call.1']
    #allocation4 [shape = 'u8[65536]{0}', space=vmem, size = 0x10000, scoped, tag = 'output window, operand 1, single buffered']
    #allocation5 [shape = 's32[1]{0}', space=sflag, size = 0x4, scoped, tag = 'scoped memory for tpu_custom_call.1']
    %12 = vsyncpa [#allocation3], 0
    %13 = vsyncpa [#allocation5], 0
    // Predicated region
    $region2: #{tpu_custom_call.1} parent=1 // pred_check
      _
    $region3: #{tpu_custom_call.1} parent=1 // pred_check_branch
      %15 = sbr.rel (0) target = $region5
    $region4: #{tpu_custom_call.1} parent=1 // pred_region
      _
    $region5: #{tpu_custom_call.1} parent=1 // pred_fallthru
      _
    // Predicated region
    $region6: #{tpu_custom_call.1} parent=1 // pred_check
      _
    $region7: #{tpu_custom_call.1} parent=1 // pred_check_branch
      %17 = sbr.rel (0) target = $region9
    $region8: #{tpu_custom_call.1} parent=1 // pred_region
      _
    $region9: #{tpu_custom_call.1} parent=1 // pred_fallthru
      _
    // Predicated region
    $region10: #{tpu_custom_call.1} parent=1 // pred_check
      _
    $region11: #{tpu_custom_call.1} parent=1 // pred_check_branch
      %19 = sbr.rel (0) target = $region13
    $region12: #{tpu_custom_call.1} parent=1 // pred_region
      _
    $region13: #{tpu_custom_call.1} parent=1 // pred_fallthru
      _
    // Predicated region
    $region14: #{tpu_custom_call.1} parent=1 // pred_check
      _
    $region15: #{tpu_custom_call.1} parent=1 // pred_check_branch
      %21 = sbr.rel (0) target = $region17
    $region16: #{tpu_custom_call.1} parent=1 // pred_region
      _
    $region17: #{tpu_custom_call.1} parent=1 // pred_fallthru
      _
    // Predicated region
    $region18: #{tpu_custom_call.1} parent=1 // pred_check
      _
    $region19: #{tpu_custom_call.1} parent=1 // pred_check_branch
      %23 = sbr.rel (0) target = $region21
    $region20: #{tpu_custom_call.1} parent=1 // pred_region
      _
    $region21: #{tpu_custom_call.1} parent=1 // pred_fallthru
      _
    %v24 = vld [vmem:[%s0] sm:$0xff]
    %v25 = vld [vmem:[%s0 + $0x8] sm:$0xff]
    %v26 = vld [vmem:[%s0 + $0x10] sm:$0xff]
    %v27 = vld [vmem:[%s0 + $0x18] sm:$0xff]
    %v28 = vld [vmem:[%s0 + $0x20] sm:$0xff]
    %v29 = vld [vmem:[%s0 + $0x28] sm:$0xff]
    %v30 = vld [vmem:[%s0 + $0x30] sm:$0xff]
    %v31 = vld [vmem:[%s0 + $0x38] sm:$0xff]
    %v32 = vld [vmem:[%s0 + $0x40] sm:$0xff]
    %v33 = vld [vmem:[%s0 + $0x48] sm:$0xff]
    %v34 = vld [vmem:[%s0 + $0x50] sm:$0xff]
    %v35 = vld [vmem:[%s0 + $0x58] sm:$0xff]
    %v36 = vld [vmem:[%s0 + $0x60] sm:$0xff]
    %v37 = vld [vmem:[%s0 + $0x68] sm:$0xff]
    %v38 = vld [vmem:[%s0 + $0x70] sm:$0xff]
    %v39 = vld [vmem:[%s0 + $0x78] sm:$0xff]
    %v40 = vld [vmem:[%s0 + $0x80] sm:$0xff]
    %v41 = vld [vmem:[%s0 + $0x88] sm:$0xff]
    %v42 = vld [vmem:[%s0 + $0x90] sm:$0xff]
    %v43 = vld [vmem:[%s0 + $0x98] sm:$0xff]
    %v44 = vld [vmem:[%s0 + $0xa0] sm:$0xff]
    %v45 = vld [vmem:[%s0 + $0xa8] sm:$0xff]
    %v46 = vld [vmem:[%s0 + $0xb0] sm:$0xff]
    %v47 = vld [vmem:[%s0 + $0xb8] sm:$0xff]
    %v48 = vld [vmem:[%s0 + $0xc0] sm:$0xff]
    %v49 = vld [vmem:[%s0 + $0xc8] sm:$0xff]
    %v50 = vld [vmem:[%s0 + $0xd0] sm:$0xff]
    %v51 = vld [vmem:[%s0 + $0xd8] sm:$0xff]
    %v52 = vld [vmem:[%s0 + $0xe0] sm:$0xff]
    %v53 = vld [vmem:[%s0 + $0xe8] sm:$0xff]
    %v54 = vld [vmem:[%s0 + $0xf0] sm:$0xff]
    %v55 = vld [vmem:[%s0 + $0xf8] sm:$0xff]
    %v56 = vld [vmem:[%s0 + $0x100] sm:$0xff]
    %v57 = vld [vmem:[%s0 + $0x108] sm:$0xff]
    %v58 = vld [vmem:[%s0 + $0x110] sm:$0xff]
    %v59 = vld [vmem:[%s0 + $0x118] sm:$0xff]
    %v60 = vld [vmem:[%s0 + $0x120] sm:$0xff]
    %v61 = vld [vmem:[%s0 + $0x128] sm:$0xff]
    %v62 = vld [vmem:[%s0 + $0x130] sm:$0xff]
    %v63 = vld [vmem:[%s0 + $0x138] sm:$0xff]
    %v64 = vld [vmem:[%s0 + $0x140] sm:$0xff]
    %v65 = vld [vmem:[%s0 + $0x148] sm:$0xff]
    %v66 = vld [vmem:[%s0 + $0x150] sm:$0xff]
    %v67 = vld [vmem:[%s0 + $0x158] sm:$0xff]
    %v68 = vld [vmem:[%s0 + $0x160] sm:$0xff]
    %v69 = vld [vmem:[%s0 + $0x168] sm:$0xff]
    %v70 = vld [vmem:[%s0 + $0x170] sm:$0xff]
    %v71 = vld [vmem:[%s0 + $0x178] sm:$0xff]
    %v72 = vld [vmem:[%s2] sm:$0xff]
    %v73 = vld [vmem:[%s2 + $0x8] sm:$0xff]
    %v74 = vld [vmem:[%s2 + $0x10] sm:$0xff]
    %v75 = vld [vmem:[%s2 + $0x18] sm:$0xff]
    %v76 = vld [vmem:[%s2 + $0x20] sm:$0xff]
    %v77 = vld [vmem:[%s2 + $0x28] sm:$0xff]
    %v78 = vld [vmem:[%s2 + $0x30] sm:$0xff]
    %v79 = vld [vmem:[%s2 + $0x38] sm:$0xff]
    %v80 = vld [vmem:[%s2 + $0x40] sm:$0xff]
    %v81 = vld [vmem:[%s2 + $0x48] sm:$0xff]
    %v82 = vld [vmem:[%s2 + $0x50] sm:$0xff]
    %v83 = vld [vmem:[%s2 + $0x58] sm:$0xff]
    %v84 = vld [vmem:[%s2 + $0x60] sm:$0xff]
    %v85 = vld [vmem:[%s2 + $0x68] sm:$0xff]
    %v86 = vld [vmem:[%s2 + $0x70] sm:$0xff]
    %v87 = vld [vmem:[%s2 + $0x78] sm:$0xff]
    %v88 = vld [vmem:[%s2 + $0x80] sm:$0xff]
    %v89 = vld [vmem:[%s2 + $0x88] sm:$0xff]
    %v90 = vld [vmem:[%s2 + $0x90] sm:$0xff]
    %v91 = vld [vmem:[%s2 + $0x98] sm:$0xff]
    %v92 = vld [vmem:[%s2 + $0xa0] sm:$0xff]
    %v93 = vld [vmem:[%s2 + $0xa8] sm:$0xff]
    %v94 = vld [vmem:[%s2 + $0xb0] sm:$0xff]
    %v95 = vld [vmem:[%s2 + $0xb8] sm:$0xff]
    %v96 = vld [vmem:[%s2 + $0xc0] sm:$0xff]
    %v97 = vld [vmem:[%s2 + $0xc8] sm:$0xff]
    %v98 = vld [vmem:[%s2 + $0xd0] sm:$0xff]
    %v99 = vld [vmem:[%s2 + $0xd8] sm:$0xff]
    %v100 = vld [vmem:[%s2 + $0xe0] sm:$0xff]
    %v101 = vld [vmem:[%s2 + $0xe8] sm:$0xff]
    %v102 = vld [vmem:[%s2 + $0xf0] sm:$0xff]
    %v103 = vld [vmem:[%s2 + $0xf8] sm:$0xff]
    %v104 = vld [vmem:[%s2 + $0x100] sm:$0xff]
    %v105 = vld [vmem:[%s2 + $0x108] sm:$0xff]
    %v106 = vld [vmem:[%s2 + $0x110] sm:$0xff]
    %v107 = vld [vmem:[%s2 + $0x118] sm:$0xff]
    %v108 = vld [vmem:[%s3] sm:$0x1]
    %v110 = vlaneseq
    %v111 = vshrl.u32 %v110, 7
    %v112 = vsub.s32 0, %v111
    %v113 = vrot.slane %v108, %v112
    %vm115 = vcmask 261120
    %v117 = vsel %vm115, %v26, 0
    %v120 = vsel %vm115, %v29, 0
    %v123 = vsel %vm115, %v32, 0
    %v126 = vsel %vm115, %v35, 0
    %v129 = vsel %vm115, %v38, 0
    %v132 = vsel %vm115, %v41, 0
    %v135 = vsel %vm115, %v44, 0
    %v138 = vsel %vm115, %v47, 0
    %v141 = vsel %vm115, %v50, 0
    %v144 = vsel %vm115, %v53, 0
    %v147 = vsel %vm115, %v56, 0
    %v150 = vsel %vm115, %v59, 0
    %v153 = vsel %vm115, %v62, 0
    %v156 = vsel %vm115, %v65, 0
    %v159 = vsel %vm115, %v68, 0
    %v162 = vsel %vm115, %v71, 0
    %164 = vmatprep.subr.mxu0 0.0
    %165 = vmatpush1.msra.mxu0 %v72
    %166 = vmatprep.subr.mxu0 0.0
    %167 = vmatpush1.msra.mxu0 %v73
    %168 = vmatprep.subr.mxu0 0.0
    %169 = vmatpush1.msra.mxu0 %v74
    %170 = vmatprep.subr.mxu0 0.0
    %171 = vmatpush1.msra.mxu0 %v75
    %172 = vmatprep.subr.mxu0 0.0
    %173 = vmatpush1.msra.mxu0 %v76
    %174 = vmatprep.subr.mxu0 0.0
    %175 = vmatpush1.msra.mxu0 %v77
    %176 = vmatprep.subr.mxu0 0.0
    %177 = vmatpush1.msra.mxu0 %v78
    %178 = vmatprep.subr.mxu0 0.0
    %179 = vmatpush1.msra.mxu0 %v79
    %180 = vmatprep.subr.mxu0 0.0
    %181 = vmatpush1.msra.mxu0 %v80
    %182 = vmatprep.subr.mxu0 0.0
    %183 = vmatpush1.msra.mxu0 %v81
    %184 = vmatprep.subr.mxu0 0.0
    %185 = vmatpush1.msra.mxu0 %v82
    %186 = vmatprep.subr.mxu0 0.0
    %187 = vmatpush1.msra.mxu0 %v83
    %188 = vmatprep.subr.mxu0 0.0
    %189 = vmatpush1.msra.mxu0 %v84
    %190 = vmatprep.subr.mxu0 0.0
    %191 = vmatpush1.msra.mxu0 %v85
    %192 = vmatprep.subr.mxu0 0.0
    %193 = vmatpush1.msra.mxu0 %v86
    %194 = vmatprep.subr.mxu0 0.0
    %195 = vmatpush1.msra.mxu0 %v87
    %196 = vmatprep.subr.mxu0 0.0
    %197 = vmatpush1.msra.mxu0 %v88
    %198 = vmatprep.subr.mxu0 0.0
    %199 = vmatpush1.msra.mxu0 %v89
    %200 = vmatprep.subr.mxu0 0.0
    %201 = vmatpush1.msra.mxu0 %v90
    %202 = vmatprep.subr.mxu0 0.0
    %203 = vmatpush1.msra.mxu0 %v91
    %204 = vmatprep.subr.mxu0 0.0
    %205 = vmatpush1.msra.mxu0 %v92
    %206 = vmatprep.subr.mxu0 0.0
    %207 = vmatpush1.msra.mxu0 %v93
    %208 = vmatprep.subr.mxu0 0.0
    %209 = vmatpush1.msra.mxu0 %v94
    %210 = vmatprep.subr.mxu0 0.0
    %211 = vmatpush1.msra.mxu0 %v95
    %212 = vmatprep.subr.mxu0 0.0
    %213 = vmatpush1.msra.mxu0 %v96
    %214 = vmatprep.subr.mxu0 0.0
    %215 = vmatpush1.msra.mxu0 %v97
    %216 = vmatprep.subr.mxu0 0.0
    %217 = vmatpush1.msra.mxu0 %v98
    %218 = vmatprep.subr.mxu0 0.0
    %219 = vmatpush1.msra.mxu0 %v99
    %220 = vmatprep.subr.mxu0 0.0
    %221 = vmatpush1.msra.mxu0 %v100
    %222 = vmatprep.subr.mxu0 0.0
    %223 = vmatpush1.msra.mxu0 %v101
    %224 = vmatprep.subr.mxu0 0.0
    %225 = vmatpush1.msra.mxu0 %v102
    %226 = vmatprep.subr.mxu0 0.0
    %227 = vmatpush1.msra.mxu0 %v103
    %228 = vmatprep.mubr.f32.mxu0 %v25
    %229 = vmatmul.mubr.f32.gmra.mrb[0].mxu0 %v24
    %v230 = vpop.f32.mrb[0].mxu0
    %v231 = vadd.f32 %v113, %v230
    %v232 = vpop.f32.mrb[0].mxu0
    %233 = vmatprep.mubr.f32.mxu0 %v28
    %234 = vmatmul.mubr.f32.gmra.mrb[0].mxu0 %v27
    %v235 = vpop.f32.mrb[0].mxu0
    %v236 = vadd.f32 %v113, %v235
    %v237 = vpop.f32.mrb[0].mxu0
    %238 = vmatprep.mubr.f32.mxu0 %v31
    %239 = vmatmul.mubr.f32.gmra.mrb[0].mxu0 %v30
    %v240 = vpop.f32.mrb[0].mxu0
    %v241 = vadd.f32 %v113, %v240
    %v242 = vpop.f32.mrb[0].mxu0
    %243 = vmatprep.mubr.f32.mxu0 %v34
    %244 = vmatmul.mubr.f32.gmra.mrb[0].mxu0 %v33
    %v245 = vpop.f32.mrb[0].mxu0
    %v246 = vadd.f32 %v113, %v245
    %v247 = vpop.f32.mrb[0].mxu0
    %248 = vmatprep.mubr.f32.mxu0 %v37
    %249 = vmatmul.mubr.f32.gmra.mrb[0].mxu0 %v36
    %v250 = vpop.f32.mrb[0].mxu0
    %v251 = vadd.f32 %v113, %v250
    %v252 = vpop.f32.mrb[0].mxu0
    %253 = vmatprep.mubr.f32.mxu0 %v40
    %254 = vmatmul.mubr.f32.gmra.mrb[0].mxu0 %v39
    %v255 = vpop.f32.mrb[0].mxu0
    %v256 = vadd.f32 %v113, %v255
    %v257 = vpop.f32.mrb[0].mxu0
    %258 = vmatprep.mubr.f32.mxu0 %v43
    %259 = vmatmul.mubr.f32.gmra.mrb[0].mxu0 %v42
    %v260 = vpop.f32.mrb[0].mxu0
    %v261 = vadd.f32 %v113, %v260
    %v262 = vpop.f32.mrb[0].mxu0
    %263 = vmatprep.mubr.f32.mxu0 %v46
    %264 = vmatmul.mubr.f32.gmra.mrb[0].mxu0 %v45
    %v265 = vpop.f32.mrb[0].mxu0
    %v266 = vadd.f32 %v113, %v265
    %v267 = vpop.f32.mrb[0].mxu0
    %268 = vmatprep.mubr.f32.mxu0 %v49
    %269 = vmatmul.mubr.f32.gmra.mrb[0].mxu0 %v48
    %v270 = vpop.f32.mrb[0].mxu0
    %v271 = vadd.f32 %v113, %v270
    %v272 = vpop.f32.mrb[0].mxu0
    %273 = vmatprep.mubr.f32.mxu0 %v52
    %274 = vmatmul.mubr.f32.gmra.mrb[0].mxu0 %v51
    %v275 = vpop.f32.mrb[0].mxu0
    %v276 = vadd.f32 %v113, %v275
    %v277 = vpop.f32.mrb[0].mxu0
    %278 = vmatprep.mubr.f32.mxu0 %v55
    %279 = vmatmul.mubr.f32.gmra.mrb[0].mxu0 %v54
    %v280 = vpop.f32.mrb[0].mxu0
    %v281 = vadd.f32 %v113, %v280
    %v282 = vpop.f32.mrb[0].mxu0
    %283 = vmatprep.mubr.f32.mxu0 %v58
    %284 = vmatmul.mubr.f32.gmra.mrb[0].mxu0 %v57
    %v285 = vpop.f32.mrb[0].mxu0
    %v286 = vadd.f32 %v113, %v285
    %v287 = vpop.f32.mrb[0].mxu0
    %288 = vmatprep.mubr.f32.mxu0 %v61
    %289 = vmatmul.mubr.f32.gmra.mrb[0].mxu0 %v60
    %v290 = vpop.f32.mrb[0].mxu0
    %v291 = vadd.f32 %v113, %v290
    %v292 = vpop.f32.mrb[0].mxu0
    %293 = vmatprep.mubr.f32.mxu0 %v64
    %294 = vmatmul.mubr.f32.gmra.mrb[0].mxu0 %v63
    %v295 = vpop.f32.mrb[0].mxu0
    %v296 = vadd.f32 %v113, %v295
    %v297 = vpop.f32.mrb[0].mxu0
    %298 = vmatprep.mubr.f32.mxu0 %v67
    %299 = vmatmul.mubr.f32.gmra.mrb[0].mxu0 %v66
    %v300 = vpop.f32.mrb[0].mxu0
    %v301 = vadd.f32 %v113, %v300
    %v302 = vpop.f32.mrb[0].mxu0
    %303 = vmatprep.mubr.f32.mxu0 %v70
    %304 = vmatmul.mubr.f32.gmra.mrb[0].mxu0 %v69
    %v305 = vpop.f32.mrb[0].mxu0
    %v306 = vadd.f32 %v113, %v305
    %v307 = vpop.f32.mrb[0].mxu0
    %308 = vdwg.mxu0
    %309 = vmatprep.subr.mxu0 0.0
    %310 = vmatpush1.msra.mxu0 %v104
    %311 = vmatprep.subr.mxu0 0.0
    %312 = vmatpush1.msra.mxu0 %v105
    %313 = vmatprep.subr.mxu0 0.0
    %314 = vmatpush1.msra.mxu0 %v106
    %315 = vmatprep.subr.mxu0 0.0
    %316 = vmatpush1.msra.mxu0 %v107
    %317 = vmatprep.subr.mxu0 0.0
    %318 = vmatpush1.msra.mxu0 0.0
    %319 = vmatprep.subr.mxu0 0.0
    %320 = vmatpush1.msra.mxu0 0.0
    %321 = vmatprep.subr.mxu0 0.0
    %322 = vmatpush1.msra.mxu0 0.0
    %323 = vmatprep.subr.mxu0 0.0
    %324 = vmatpush1.msra.mxu0 0.0
    %325 = vmatprep.subr.mxu0 0.0
    %326 = vmatpush1.msra.mxu0 0.0
    %327 = vmatprep.subr.mxu0 0.0
    %328 = vmatpush1.msra.mxu0 0.0
    %329 = vmatprep.subr.mxu0 0.0
    %330 = vmatpush1.msra.mxu0 0.0
    %331 = vmatprep.subr.mxu0 0.0
    %332 = vmatpush1.msra.mxu0 0.0
    %333 = vmatprep.subr.mxu0 0.0
    %334 = vmatpush1.msra.mxu0 0.0
    %335 = vmatprep.subr.mxu0 0.0
    %336 = vmatpush1.msra.mxu0 0.0
    %337 = vmatprep.subr.mxu0 0.0
    %338 = vmatpush1.msra.mxu0 0.0
    %339 = vmatprep.subr.mxu0 0.0
    %340 = vmatpush1.msra.mxu0 0.0
    %341 = vmatprep.subr.mxu0 0.0
    %342 = vmatpush1.msra.mxu0 0.0
    %343 = vmatprep.subr.mxu0 0.0
    %344 = vmatpush1.msra.mxu0 0.0
    %345 = vmatprep.subr.mxu0 0.0
    %346 = vmatpush1.msra.mxu0 0.0
    %347 = vmatprep.subr.mxu0 0.0
    %348 = vmatpush1.msra.mxu0 0.0
    %349 = vmatprep.subr.mxu0 0.0
    %350 = vmatpush1.msra.mxu0 0.0
    %351 = vmatprep.subr.mxu0 0.0
    %352 = vmatpush1.msra.mxu0 0.0
    %353 = vmatprep.subr.mxu0 0.0
    %354 = vmatpush1.msra.mxu0 0.0
    %355 = vmatprep.subr.mxu0 0.0
    %356 = vmatpush1.msra.mxu0 0.0
    %357 = vmatprep.subr.mxu0 0.0
    %358 = vmatpush1.msra.mxu0 0.0
    %359 = vmatprep.subr.mxu0 0.0
    %360 = vmatpush1.msra.mxu0 0.0
    %361 = vmatprep.subr.mxu0 0.0
    %362 = vmatpush1.msra.mxu0 0.0
    %363 = vmatprep.subr.mxu0 0.0
    %364 = vmatpush1.msra.mxu0 0.0
    %365 = vmatprep.subr.mxu0 0.0
    %366 = vmatpush1.msra.mxu0 0.0
    %367 = vmatprep.subr.mxu0 0.0
    %368 = vmatpush1.msra.mxu0 0.0
    %369 = vmatprep.subr.mxu0 0.0
    %370 = vmatpush1.msra.mxu0 0.0
    %371 = vmatprep.subr.mxu0 0.0
    %372 = vmatpush1.msra.mxu0 0.0
    %373 = vmatprep.mubr.f32.mxu0 0.0
    %374 = vmatmul.mubr.f32.gmra.mrb[0].mxu0 %v117
    %v375 = vpop.f32.mrb[0].mxu0
    %v376 = vadd.f32 %v231, %v375
    %v377 = vpop.f32.mrb[0].mxu0
    %378 = vmatprep.mubr.f32.mxu0 0.0
    %379 = vmatmul.mubr.f32.gmra.mrb[0].mxu0 %v120
    %v380 = vpop.f32.mrb[0].mxu0
    %v381 = vadd.f32 %v236, %v380
    %v382 = vpop.f32.mrb[0].mxu0
    %383 = vmatprep.mubr.f32.mxu0 0.0
    %384 = vmatmul.mubr.f32.gmra.mrb[0].mxu0 %v123
    %v385 = vpop.f32.mrb[0].mxu0
    %v386 = vadd.f32 %v241, %v385
    %v387 = vpop.f32.mrb[0].mxu0
    %388 = vmatprep.mubr.f32.mxu0 0.0
    %389 = vmatmul.mubr.f32.gmra.mrb[0].mxu0 %v126
    %v390 = vpop.f32.mrb[0].mxu0
    %v391 = vadd.f32 %v246, %v390
    %v392 = vpop.f32.mrb[0].mxu0
    %393 = vmatprep.mubr.f32.mxu0 0.0
    %394 = vmatmul.mubr.f32.gmra.mrb[0].mxu0 %v129
    %v395 = vpop.f32.mrb[0].mxu0
    %v396 = vadd.f32 %v251, %v395
    %v397 = vpop.f32.mrb[0].mxu0
    %398 = vmatprep.mubr.f32.mxu0 0.0
    %399 = vmatmul.mubr.f32.gmra.mrb[0].mxu0 %v132
    %v400 = vpop.f32.mrb[0].mxu0
    %v401 = vadd.f32 %v256, %v400
    %v402 = vpop.f32.mrb[0].mxu0
    %403 = vmatprep.mubr.f32.mxu0 0.0
    %404 = vmatmul.mubr.f32.gmra.mrb[0].mxu0 %v135
    %v405 = vpop.f32.mrb[0].mxu0
    %v406 = vadd.f32 %v261, %v405
    %v407 = vpop.f32.mrb[0].mxu0
    %408 = vmatprep.mubr.f32.mxu0 0.0
    %409 = vmatmul.mubr.f32.gmra.mrb[0].mxu0 %v138
    %v410 = vpop.f32.mrb[0].mxu0
    %v411 = vadd.f32 %v266, %v410
    %v412 = vpop.f32.mrb[0].mxu0
    %413 = vmatprep.mubr.f32.mxu0 0.0
    %414 = vmatmul.mubr.f32.gmra.mrb[0].mxu0 %v141
    %v415 = vpop.f32.mrb[0].mxu0
    %v416 = vadd.f32 %v271, %v415
    %v417 = vpop.f32.mrb[0].mxu0
    %418 = vmatprep.mubr.f32.mxu0 0.0
    %419 = vmatmul.mubr.f32.gmra.mrb[0].mxu0 %v144
    %v420 = vpop.f32.mrb[0].mxu0
    %v421 = vadd.f32 %v276, %v420
    %v422 = vpop.f32.mrb[0].mxu0
    %423 = vmatprep.mubr.f32.mxu0 0.0
    %424 = vmatmul.mubr.f32.gmra.mrb[0].mxu0 %v147
    %v425 = vpop.f32.mrb[0].mxu0
    %v426 = vadd.f32 %v281, %v425
    %v427 = vpop.f32.mrb[0].mxu0
    %428 = vmatprep.mubr.f32.mxu0 0.0
    %429 = vmatmul.mubr.f32.gmra.mrb[0].mxu0 %v150
    %v430 = vpop.f32.mrb[0].mxu0
    %v431 = vadd.f32 %v286, %v430
    %v432 = vpop.f32.mrb[0].mxu0
    %433 = vmatprep.mubr.f32.mxu0 0.0
    %434 = vmatmul.mubr.f32.gmra.mrb[0].mxu0 %v153
    %v435 = vpop.f32.mrb[0].mxu0
    %v436 = vadd.f32 %v291, %v435
    %v437 = vpop.f32.mrb[0].mxu0
    %438 = vmatprep.mubr.f32.mxu0 0.0
    %439 = vmatmul.mubr.f32.gmra.mrb[0].mxu0 %v156
    %v440 = vpop.f32.mrb[0].mxu0
    %v441 = vadd.f32 %v296, %v440
    %v442 = vpop.f32.mrb[0].mxu0
    %443 = vmatprep.mubr.f32.mxu0 0.0
    %444 = vmatmul.mubr.f32.gmra.mrb[0].mxu0 %v159
    %v445 = vpop.f32.mrb[0].mxu0
    %v446 = vadd.f32 %v301, %v445
    %v447 = vpop.f32.mrb[0].mxu0
    %448 = vmatprep.mubr.f32.mxu0 0.0
    %449 = vmatmul.mubr.f32.gmra.mrb[0].mxu0 %v162
    %v450 = vpop.f32.mrb[0].mxu0
    %v451 = vadd.f32 %v306, %v450
    %v452 = vpop.f32.mrb[0].mxu0
    %453 = vdwg.mxu0
    %454 = vst [vmem:[#allocation2] sm:$0xff] %v376
    %455 = vst [vmem:[#allocation2 + $0x8] sm:$0xff] %v381
    %456 = vst [vmem:[#allocation2 + $0x10] sm:$0xff] %v386
    %457 = vst [vmem:[#allocation2 + $0x18] sm:$0xff] %v391
    %458 = vst [vmem:[#allocation2 + $0x20] sm:$0xff] %v396
    %459 = vst [vmem:[#allocation2 + $0x28] sm:$0xff] %v401
    %460 = vst [vmem:[#allocation2 + $0x30] sm:$0xff] %v406
    %461 = vst [vmem:[#allocation2 + $0x38] sm:$0xff] %v411
    %462 = vst [vmem:[#allocation2 + $0x40] sm:$0xff] %v416
    %463 = vst [vmem:[#allocation2 + $0x48] sm:$0xff] %v421
    %464 = vst [vmem:[#allocation2 + $0x50] sm:$0xff] %v426
    %465 = vst [vmem:[#allocation2 + $0x58] sm:$0xff] %v431
    %466 = vst [vmem:[#allocation2 + $0x60] sm:$0xff] %v436
    %467 = vst [vmem:[#allocation2 + $0x68] sm:$0xff] %v441
    %468 = vst [vmem:[#allocation2 + $0x70] sm:$0xff] %v446
    %469 = vst [vmem:[#allocation2 + $0x78] sm:$0xff] %v451
    %v470 = vld [vmem:[%s1] sm:$0xff]
    %v471 = vld [vmem:[%s1 + $0x8] sm:$0xff]
    %v472 = vld [vmem:[%s1 + $0x10] sm:$0xff]
    %v473 = vld [vmem:[%s1 + $0x18] sm:$0xff]
    %v474 = vld [vmem:[%s1 + $0x20] sm:$0xff]
    %v475 = vld [vmem:[%s1 + $0x28] sm:$0xff]
    %v476 = vld [vmem:[%s1 + $0x30] sm:$0xff]
    %v477 = vld [vmem:[%s1 + $0x38] sm:$0xff]
    %v478 = vld [vmem:[%s1 + $0x40] sm:$0xff]
    %v479 = vld [vmem:[%s1 + $0x48] sm:$0xff]
    %v480 = vld [vmem:[%s1 + $0x50] sm:$0xff]
    %v481 = vld [vmem:[%s1 + $0x58] sm:$0xff]
    %v482 = vld [vmem:[%s1 + $0x60] sm:$0xff]
    %v483 = vld [vmem:[%s1 + $0x68] sm:$0xff]
    %v484 = vld [vmem:[%s1 + $0x70] sm:$0xff]
    %v485 = vld [vmem:[%s1 + $0x78] sm:$0xff]
    %v486 = vld [vmem:[%s4] sm:$0xff]
    %v487 = vld [vmem:[%s4 + $0x8] sm:$0xff]
    %v488 = vld [vmem:[%s4 + $0x10] sm:$0xff]
    %v489 = vld [vmem:[%s4 + $0x18] sm:$0xff]
    %v490 = vld [vmem:[%s4 + $0x20] sm:$0xff]
    %v491 = vld [vmem:[%s4 + $0x28] sm:$0xff]
    %v492 = vld [vmem:[%s4 + $0x30] sm:$0xff]
    %v493 = vld [vmem:[%s4 + $0x38] sm:$0xff]
    %v494 = vld [vmem:[%s4 + $0x40] sm:$0xff]
    %v495 = vld [vmem:[%s4 + $0x48] sm:$0xff]
    %v496 = vld [vmem:[%s4 + $0x50] sm:$0xff]
    %v497 = vld [vmem:[%s4 + $0x58] sm:$0xff]
    %v498 = vld [vmem:[%s4 + $0x60] sm:$0xff]
    %v499 = vld [vmem:[%s4 + $0x68] sm:$0xff]
    %v500 = vld [vmem:[%s4 + $0x70] sm:$0xff]
    %v501 = vld [vmem:[%s4 + $0x78] sm:$0xff]
    %502 = vmatprep.subr.mxu0 0.0
    %503 = vmatpush1.msra.mxu0 %v486
    %504 = vmatprep.subr.mxu0 0.0
    %505 = vmatpush1.msra.mxu0 %v487
    %506 = vmatprep.subr.mxu0 0.0
    %507 = vmatpush1.msra.mxu0 %v488
    %508 = vmatprep.subr.mxu0 0.0
    %509 = vmatpush1.msra.mxu0 %v489
    %510 = vmatprep.subr.mxu0 0.0
    %511 = vmatpush1.msra.mxu0 %v490
    %512 = vmatprep.subr.mxu0 0.0
    %513 = vmatpush1.msra.mxu0 %v491
    %514 = vmatprep.subr.mxu0 0.0
    %515 = vmatpush1.msra.mxu0 %v492
    %516 = vmatprep.subr.mxu0 0.0
    %517 = vmatpush1.msra.mxu0 %v493
    %518 = vmatprep.subr.mxu0 0.0
    %519 = vmatpush1.msra.mxu0 %v494
    %520 = vmatprep.subr.mxu0 0.0
    %521 = vmatpush1.msra.mxu0 %v495
    %522 = vmatprep.subr.mxu0 0.0
    %523 = vmatpush1.msra.mxu0 %v496
    %524 = vmatprep.subr.mxu0 0.0
    %525 = vmatpush1.msra.mxu0 %v497
    %526 = vmatprep.subr.mxu0 0.0
    %527 = vmatpush1.msra.mxu0 %v498
    %528 = vmatprep.subr.mxu0 0.0
    %529 = vmatpush1.msra.mxu0 %v499
    %530 = vmatprep.subr.mxu0 0.0
    %531 = vmatpush1.msra.mxu0 %v500
    %532 = vmatprep.subr.mxu0 0.0
    %533 = vmatpush1.msra.mxu0 %v501
    %534 = vmatprep.subr.mxu0 0.0
    %535 = vmatpush1.msra.mxu0 0.0
    %536 = vmatprep.subr.mxu0 0.0
    %537 = vmatpush1.msra.mxu0 0.0
    %538 = vmatprep.subr.mxu0 0.0
    %539 = vmatpush1.msra.mxu0 0.0
    %540 = vmatprep.subr.mxu0 0.0
    %541 = vmatpush1.msra.mxu0 0.0
    %542 = vmatprep.subr.mxu0 0.0
    %543 = vmatpush1.msra.mxu0 0.0
    %544 = vmatprep.subr.mxu0 0.0
    %545 = vmatpush1.msra.mxu0 0.0
    %546 = vmatprep.subr.mxu0 0.0
    %547 = vmatpush1.msra.mxu0 0.0
    %548 = vmatprep.subr.mxu0 0.0
    %549 = vmatpush1.msra.mxu0 0.0
    %550 = vmatprep.subr.mxu0 0.0
    %551 = vmatpush1.msra.mxu0 0.0
    %552 = vmatprep.subr.mxu0 0.0
    %553 = vmatpush1.msra.mxu0 0.0
    %554 = vmatprep.subr.mxu0 0.0
    %555 = vmatpush1.msra.mxu0 0.0
    %556 = vmatprep.subr.mxu0 0.0
    %557 = vmatpush1.msra.mxu0 0.0
    %558 = vmatprep.subr.mxu0 0.0
    %559 = vmatpush1.msra.mxu0 0.0
    %560 = vmatprep.subr.mxu0 0.0
    %561 = vmatpush1.msra.mxu0 0.0
    %562 = vmatprep.subr.mxu0 0.0
    %563 = vmatpush1.msra.mxu0 0.0
    %564 = vmatprep.subr.mxu0 0.0
    %565 = vmatpush1.msra.mxu0 0.0
    %566 = vmatprep.mubr.f32.mxu0 0.0
    %567 = vmatmul.mubr.f32.gmra.mrb[0].mxu0 %v470
    %v568 = vpop.f32.mrb[0].mxu0
    %v569 = vadd.f32 0.0, %v568
    %v570 = vpop.f32.mrb[0].mxu0
    %571 = vmatprep.mubr.f32.mxu0 0.0
    %572 = vmatmul.mubr.f32.gmra.mrb[0].mxu0 %v471
    %v573 = vpop.f32.mrb[0].mxu0
    %v574 = vadd.f32 0.0, %v573
    %v575 = vpop.f32.mrb[0].mxu0
    %576 = vmatprep.mubr.f32.mxu0 0.0
    %577 = vmatmul.mubr.f32.gmra.mrb[0].mxu0 %v472
    %v578 = vpop.f32.mrb[0].mxu0
    %v579 = vadd.f32 0.0, %v578
    %v580 = vpop.f32.mrb[0].mxu0
    %581 = vmatprep.mubr.f32.mxu0 0.0
    %582 = vmatmul.mubr.f32.gmra.mrb[0].mxu0 %v473
    %v583 = vpop.f32.mrb[0].mxu0
    %v584 = vadd.f32 0.0, %v583
    %v585 = vpop.f32.mrb[0].mxu0
    %586 = vmatprep.mubr.f32.mxu0 0.0
    %587 = vmatmul.mubr.f32.gmra.mrb[0].mxu0 %v474
    %v588 = vpop.f32.mrb[0].mxu0
    %v589 = vadd.f32 0.0, %v588
    %v590 = vpop.f32.mrb[0].mxu0
    %591 = vmatprep.mubr.f32.mxu0 0.0
    %592 = vmatmul.mubr.f32.gmra.mrb[0].mxu0 %v475
    %v593 = vpop.f32.mrb[0].mxu0
    %v594 = vadd.f32 0.0, %v593
    %v595 = vpop.f32.mrb[0].mxu0
    %596 = vmatprep.mubr.f32.mxu0 0.0
    %597 = vmatmul.mubr.f32.gmra.mrb[0].mxu0 %v476
    %v598 = vpop.f32.mrb[0].mxu0
    %v599 = vadd.f32 0.0, %v598
    %v600 = vpop.f32.mrb[0].mxu0
    %601 = vmatprep.mubr.f32.mxu0 0.0
    %602 = vmatmul.mubr.f32.gmra.mrb[0].mxu0 %v477
    %v603 = vpop.f32.mrb[0].mxu0
    %v604 = vadd.f32 0.0, %v603
    %v605 = vpop.f32.mrb[0].mxu0
    %606 = vmatprep.mubr.f32.mxu0 0.0
    %607 = vmatmul.mubr.f32.gmra.mrb[0].mxu0 %v478
    %v608 = vpop.f32.mrb[0].mxu0
    %v609 = vadd.f32 0.0, %v608
    %v610 = vpop.f32.mrb[0].mxu0
    %611 = vmatprep.mubr.f32.mxu0 0.0
    %612 = vmatmul.mubr.f32.gmra.mrb[0].mxu0 %v479
    %v613 = vpop.f32.mrb[0].mxu0
    %v614 = vadd.f32 0.0, %v613
    %v615 = vpop.f32.mrb[0].mxu0
    %616 = vmatprep.mubr.f32.mxu0 0.0
    %617 = vmatmul.mubr.f32.gmra.mrb[0].mxu0 %v480
    %v618 = vpop.f32.mrb[0].mxu0
    %v619 = vadd.f32 0.0, %v618
    %v620 = vpop.f32.mrb[0].mxu0
    %621 = vmatprep.mubr.f32.mxu0 0.0
    %622 = vmatmul.mubr.f32.gmra.mrb[0].mxu0 %v481
    %v623 = vpop.f32.mrb[0].mxu0
    %v624 = vadd.f32 0.0, %v623
    %v625 = vpop.f32.mrb[0].mxu0
    %626 = vmatprep.mubr.f32.mxu0 0.0
    %627 = vmatmul.mubr.f32.gmra.mrb[0].mxu0 %v482
    %v628 = vpop.f32.mrb[0].mxu0
    %v629 = vadd.f32 0.0, %v628
    %v630 = vpop.f32.mrb[0].mxu0
    %631 = vmatprep.mubr.f32.mxu0 0.0
    %632 = vmatmul.mubr.f32.gmra.mrb[0].mxu0 %v483
    %v633 = vpop.f32.mrb[0].mxu0
    %v634 = vadd.f32 0.0, %v633
    %v635 = vpop.f32.mrb[0].mxu0
    %636 = vmatprep.mubr.f32.mxu0 0.0
    %637 = vmatmul.mubr.f32.gmra.mrb[0].mxu0 %v484
    %v638 = vpop.f32.mrb[0].mxu0
    %v639 = vadd.f32 0.0, %v638
    %v640 = vpop.f32.mrb[0].mxu0
    %641 = vmatprep.mubr.f32.mxu0 0.0
    %642 = vmatmul.mubr.f32.gmra.mrb[0].mxu0 %v485
    %v643 = vpop.f32.mrb[0].mxu0
    %v644 = vadd.f32 0.0, %v643
    %v645 = vpop.f32.mrb[0].mxu0
    %646 = vdwg.mxu0
    %647 = vst [vmem:[#allocation4] sm:$0xff] %v569
    %648 = vst [vmem:[#allocation4 + $0x8] sm:$0xff] %v574
    %649 = vst [vmem:[#allocation4 + $0x10] sm:$0xff] %v579
    %650 = vst [vmem:[#allocation4 + $0x18] sm:$0xff] %v584
    %651 = vst [vmem:[#allocation4 + $0x20] sm:$0xff] %v589
    %652 = vst [vmem:[#allocation4 + $0x28] sm:$0xff] %v594
    %653 = vst [vmem:[#allocation4 + $0x30] sm:$0xff] %v599
    %654 = vst [vmem:[#allocation4 + $0x38] sm:$0xff] %v604
    %655 = vst [vmem:[#allocation4 + $0x40] sm:$0xff] %v609
    %656 = vst [vmem:[#allocation4 + $0x48] sm:$0xff] %v614
    %657 = vst [vmem:[#allocation4 + $0x50] sm:$0xff] %v619
    %658 = vst [vmem:[#allocation4 + $0x58] sm:$0xff] %v624
    %659 = vst [vmem:[#allocation4 + $0x60] sm:$0xff] %v629
    %660 = vst [vmem:[#allocation4 + $0x68] sm:$0xff] %v634
    %661 = vst [vmem:[#allocation4 + $0x70] sm:$0xff] %v639
    %662 = vst [vmem:[#allocation4 + $0x78] sm:$0xff] %v644
    // Predicated region
    $region22: #{tpu_custom_call.1} parent=1 // pred_check
      _
    $region23: #{tpu_custom_call.1} parent=1 // pred_check_branch
      %664 = sbr.rel (0) target = $region25
    $region24: #{tpu_custom_call.1} parent=1 // pred_region
      %s666 = ssub.s32 2048, 2048
      %667 = vsyncadd [#allocation3], %s666
      %s668 = sshll.u32 [#allocation2], 4
      %s669 = int_to_ptr.vmem [resolvable:$true] %s668
      %674 = dma.vmem_to_hbm [thread:$0]  %s669, 2048, %s5, [#allocation3], 128, 128, 8
    $region25: #{tpu_custom_call.1} parent=1 // pred_fallthru
      _
    // Predicated region
    $region26: #{tpu_custom_call.1} parent=1 // pred_check
      _
    $region27: #{tpu_custom_call.1} parent=1 // pred_check_branch
      %676 = sbr.rel (0) target = $region29
    $region28: #{tpu_custom_call.1} parent=1 // pred_region
      %s678 = ssub.s32 2048, 2048
      %679 = vsyncadd [#allocation5], %s678
      %s680 = sshll.u32 [#allocation4], 4
      %s681 = int_to_ptr.vmem [resolvable:$true] %s680
      %686 = dma.vmem_to_hbm [thread:$0]  %s681, 2048, %s6, [#allocation5], 128, 128, 8
    $region29: #{tpu_custom_call.1} parent=1 // pred_fallthru
      _
    // Predicated region
    $region30: #{tpu_custom_call.1} parent=1 // pred_check
      _
    $region31: #{tpu_custom_call.1} parent=1 // pred_check_branch
      %688 = sbr.rel (0) target = $region33
    $region32: #{tpu_custom_call.1} parent=1 // pred_region
      %689 = dma.done [#allocation3], 2048
    $region33: #{tpu_custom_call.1} parent=1 // pred_fallthru
      _
    // Predicated region
    $region34: #{tpu_custom_call.1} parent=1 // pred_check
      _
    $region35: #{tpu_custom_call.1} parent=1 // pred_check_branch
      %691 = sbr.rel (0) target = $region37
    $region36: #{tpu_custom_call.1} parent=1 // pred_region
      %692 = dma.done [#allocation5], 2048
    $region37: #{tpu_custom_call.1} parent=1 // pred_fallthru
      _
    %693 = vsyncpa [#allocation3], 1
    %694 = vsyncpa [#allocation5], 1

</llo_original>
